<compile_context>
chip_gen: v5e
topology: v5e:2x2
jax: 0.10.0
libtpu: 0.0.40
codegen_flags: <defaults>
</compile_context>

<pallas_src>
import functools

import jax
import jax.numpy as jnp
from jax import lax
from jax.experimental import pallas as pl
from jax.experimental.pallas import tpu as pltpu


def _temporal_block_kernel(x_ref, w1_ref, b1_ref, w2_ref, b2_ref, bd_ref,
                           o_ref, xh_ref, hh_ref, *, dilation, kernel_size):
    """Fused TemporalBlock for one (batch row, time tile) grid step.

    x_ref  : (TL, Cin)            bf16 input tile (batch dim squeezed)
    w1_ref : (Cin, K*Cmid + Cout) bf16 fused [conv1 taps | 1x1 downsample]
    b1_ref : (1, Cmid) f32        conv1 bias
    w2_ref : (Cmid, K*Cout) bf16  fused conv2 taps
    b2_ref : (1, Cout) f32        conv2 bias
    bd_ref : (1, Cout) f32        downsample bias (zeros for identity residual)
    o_ref  : (TL, Cout) f32       output tile
    xh_ref : (P, Cin)  bf16 scratch: last P input rows of the previous time tile
    hh_ref : (P, Cmid) bf16 scratch: last P layer-1 activations of the previous tile
    """
    K = kernel_size
    d = dilation
    TL = x_ref.shape[0]
    Cmid = hh_ref.shape[1]
    Cout = o_ref.shape[1]
    P = xh_ref.shape[0]
    assert P == (K - 1) * d

    t = pl.program_id(1)

    # History scratch persists across grid steps; zero it at the start of every
    # sequence.  Time is the last (sequential) grid axis, so t == 0 runs first for
    # each batch row and the zero history == the causal zero padding.
    @pl.when(t == 0)
    def _init():
        xh_ref[...] = jnp.zeros_like(xh_ref)
        hh_ref[...] = jnp.zeros_like(hh_ref)

    x_t = x_ref[...]                                           # (TL, Cin) bf16
    xfull = jnp.concatenate([xh_ref[...], x_t], axis=0)        # (P+TL, Cin)

    # ---- layer 1 + downsample: ONE wide rank-2 MXU matmul over P+TL rows ----
    y1 = jnp.dot(xfull, w1_ref[...],
                 preferred_element_type=jnp.float32)           # (P+TL, K*Cmid+Cout)

    # causal tap combination = shifted static slices of the fused matmul result
    acc1 = b1_ref[...] + y1[0:TL, 0:Cmid]                      # tap k = 0
    for k in range(1, K):
        acc1 = acc1 + y1[k * d:k * d + TL, k * Cmid:(k + 1) * Cmid]
    h = jnp.maximum(acc1, 0.0)                                 # (TL, Cmid) f32

    # residual branch: free lane-slice of the same matmul (rows P .. P+TL)
    res = bd_ref[...] + y1[P:P + TL, K * Cmid:K * Cmid + Cout]  # (TL, Cout) f32

    # ---- layer 2: ONE wide matmul over history + current activations ----
    h_lp = h.astype(hh_ref.dtype)                              # bf16 for the MXU
    hfull = jnp.concatenate([hh_ref[...], h_lp], axis=0)       # (P+TL, Cmid)
    y2 = jnp.dot(hfull, w2_ref[...],
                 preferred_element_type=jnp.float32)           # (P+TL, K*Cout)

    acc2 = b2_ref[...] + y2[0:TL, 0:Cout]
    for k in range(1, K):
        acc2 = acc2 + y2[k * d:k * d + TL, k * Cout:(k + 1) * Cout]

    # ---- final ReLU after the residual add ----
    o_ref[...] = jnp.maximum(acc2 + res, 0.0).astype(o_ref.dtype)

    # carry the last P rows into the next time tile of this sequence
    xh_ref[...] = x_t[TL - P:TL, :]
    hh_ref[...] = h_lp[TL - P:TL, :]


def temporal_block_forward(x_ncl, w1_oik, b1, w2_oik, b2, wd_oi=None, bd=None, *,
                           dilation, block_len=None):
    """x_ncl: (N, Cin, L) PyTorch layout.  Conv weights in PyTorch Conv1d layout.

    wd_oi=None / bd=None means no downsample (identity residual, Cin == Cout).
    """
    N, Cin, L = x_ncl.shape
    Cmid, _, K = w1_oik.shape
    Cout = w2_oik.shape[0]
    P = (K - 1) * dilation  # causal padding (== `padding` arg of the module)
    assert K >= 2, "kernel_size == 1 degenerates to pointwise convs"  # TODO(synk)

    if wd_oi is None:
        assert Cin == Cout, "identity residual requires n_inputs == n_outputs"
        wd_oi = jnp.eye(Cout, Cin, dtype=jnp.float32)
    if bd is None:
        bd = jnp.zeros((Cout,), jnp.float32)

    # time tiling: TL time steps per grid step (one batch row per step)
    TL = (L if L <= 512 else 512) if block_len is None else block_len
    if TL != L:
        assert L % TL == 0 and TL % 8 == 0, (L, TL)
    assert TL >= P, "time tile must be >= causal receptive-field overlap"

    cdt = jnp.bfloat16
    # fused weights: [tap0 | ... | tapK-1 | downsample]  (bf16 for the MXU)
    w1cat = jnp.concatenate(
        [jnp.transpose(w1_oik, (1, 2, 0)).reshape(Cin, K * Cmid),
         jnp.transpose(wd_oi, (1, 0))], axis=1).astype(cdt)       # (Cin, K*Cmid+Cout)
    w2cat = jnp.transpose(w2_oik, (1, 2, 0)).reshape(Cmid, K * Cout).astype(cdt)
    x_nlc = jnp.transpose(x_ncl, (0, 2, 1)).astype(cdt)           # (N, L, Cin) bf16
    b1r = b1.astype(jnp.float32)[None, :]
    b2r = b2.astype(jnp.float32)[None, :]
    bdr = bd.astype(jnp.float32)[None, :]

    kernel = functools.partial(_temporal_block_kernel,
                               dilation=dilation, kernel_size=K)

    out_nlc = pl.pallas_call(
        kernel,
        out_shape=jax.ShapeDtypeStruct((N, L, Cout), jnp.float32),
        grid_spec=pltpu.PrefetchScalarGridSpec(
            num_scalar_prefetch=0,
            grid=(N, L // TL),   # time axis last -> sequential (history carry)
            in_specs=[
                pl.BlockSpec((None, TL, Cin), lambda b, t: (b, t, 0)),
                pl.BlockSpec((Cin, K * Cmid + Cout), lambda b, t: (0, 0)),
                pl.BlockSpec((1, Cmid), lambda b, t: (0, 0)),
                pl.BlockSpec((Cmid, K * Cout), lambda b, t: (0, 0)),
                pl.BlockSpec((1, Cout), lambda b, t: (0, 0)),
                pl.BlockSpec((1, Cout), lambda b, t: (0, 0)),
            ],
            out_specs=pl.BlockSpec((None, TL, Cout), lambda b, t: (b, t, 0)),
            scratch_shapes=[pltpu.VMEM((P, Cin), cdt),
                            pltpu.VMEM((P, Cmid), cdt)],
        ),
        compiler_params=pltpu.CompilerParams(
            dimension_semantics=("parallel", "arbitrary"),
            vmem_limit_bytes=32 * 1024 * 1024),
    )(x_nlc, w1cat, b1r, w2cat, b2r, bdr)

    return jnp.transpose(out_nlc, (0, 2, 1))  # back to NCL


def temporal_block_ref(x, w1, b1, w2, b2, wd=None, bd=None, *, dilation):
    """Pure-JAX (f32) reference mirroring the PyTorch module in eval mode."""
    K = w1.shape[2]
    P = (K - 1) * dilation

    def conv_chomp(inp, w, b):
        y = lax.conv_general_dilated(
            inp, w, window_strides=(1,), padding=[(P, P)],
            rhs_dilation=(dilation,), dimension_numbers=('NCH', 'OIH', 'NCH'))
        y = y[:, :, :inp.shape[2]]  # Chomp1d(padding)
        return y + b[None, :, None]

    h = jnp.maximum(conv_chomp(x, w1, b1), 0.0)   # temp_layer1 (ReLU)
    out = conv_chomp(h, w2, b2)                   # temp_layer2 (no ReLU)
    if wd is None:
        res = x
    else:
        res = jnp.einsum('ncl,oc->nol', x, wd) + bd[None, :, None]
    return jnp.maximum(out + res, 0.0)


if __name__ == "__main__":
    # TODO(synk): stride > 1, groups != 1, batch_norm/weight_norm, training-mode
    # dropout and the residual=False variant are not covered (dropout / weight_norm
    # are identity / foldable at inference).
    key = jax.random.PRNGKey(0)

    def run_case(N, Cin, Cmid, Cout, L, K, dilation, TL, downsample, case_key):
        ks = jax.random.split(case_key, 7)
        s = 0.1
        w1 = jax.random.normal(ks[0], (Cmid, Cin, K), jnp.float32) * s   # (O,I,K)
        b1 = jax.random.normal(ks[1], (Cmid,), jnp.float32) * s
        w2 = jax.random.normal(ks[2], (Cout, Cmid, K), jnp.float32) * s
        b2 = jax.random.normal(ks[3], (Cout,), jnp.float32) * s
        if downsample:
            wd = jax.random.normal(ks[4], (Cout, Cin), jnp.float32) * s
            bd = jax.random.normal(ks[5], (Cout,), jnp.float32) * s
        else:
            wd = bd = None
        x = jax.random.normal(ks[6], (N, Cin, L), jnp.float32)

        out = temporal_block_forward(x, w1, b1, w2, b2, wd, bd,
                                     dilation=dilation, block_len=TL)
        out = jax.block_until_ready(out)
        ref = temporal_block_ref(x, w1, b1, w2, b2, wd, bd, dilation=dilation)
        assert out.shape == (N, Cout, L), out.shape
        err = float(jnp.max(jnp.abs(out - ref)))
        # bf16 matmul inputs vs. f32 reference -> relaxed tolerance
        assert jnp.allclose(out, ref, atol=3e-2, rtol=3e-2), f"max abs err {err}"
        return err

    # TemporalBlock(8, (16, 24), kernel_size=3, stride=1, dilation=2, padding=4)
    # downsample active (8 != 24); 2 time tiles exercise the history carry.
    run_case(N=2, Cin=8, Cmid=16, Cout=24, L=32, K=3, dilation=2,
             TL=16, downsample=True, case_key=jax.random.fold_in(key, 0))
    # identity-residual case: n_inputs == n_outputs -> no downsample module.
    run_case(N=2, Cin=8, Cmid=16, Cout=8, L=16, K=3, dilation=2,
             TL=None, downsample=False, case_key=jax.random.fold_in(key, 1))

    print("KERNEL_OK")
</pallas_src>

<mosaic_0001>
module attributes {stable_mosaic.version = 11 : i64} {
  func.func @_temporal_block_kernel(%arg0: i32, %arg1: i32, %arg2: memref<1x16x8xbf16, #tpu.memory_space<vmem>>, %arg3: memref<8x72xbf16, #tpu.memory_space<vmem>>, %arg4: memref<1x16xf32, #tpu.memory_space<vmem>>, %arg5: memref<16x72xbf16, #tpu.memory_space<vmem>>, %arg6: memref<1x24xf32, #tpu.memory_space<vmem>>, %arg7: memref<1x24xf32, #tpu.memory_space<vmem>>, %arg8: memref<1x16x24xf32, #tpu.memory_space<vmem>>, %arg9: memref<4x8xbf16, #tpu.memory_space<vmem>>, %arg10: memref<4x16xbf16, #tpu.memory_space<vmem>>) attributes {dimension_semantics = [#tpu.dimension_semantics<parallel>, #tpu.dimension_semantics<arbitrary>], iteration_bounds = array<i64: 2, 2>, scalar_prefetch = 0 : i64, scratch_operands = 2 : i64, tpu.core_type = #tpu.core_type<tc>, window_params = [{transform_indices = @transform_0, window_bounds = array<i64: 1, 16, 8>}, {pipeline_mode = #tpu.pipeline_mode<synchronous>, transform_indices = @transform_1, window_bounds = array<i64: 8, 72>}, {pipeline_mode = #tpu.pipeline_mode<synchronous>, transform_indices = @transform_2, window_bounds = array<i64: 1, 16>}, {pipeline_mode = #tpu.pipeline_mode<synchronous>, transform_indices = @transform_3, window_bounds = array<i64: 16, 72>}, {pipeline_mode = #tpu.pipeline_mode<synchronous>, transform_indices = @transform_4, window_bounds = array<i64: 1, 24>}, {pipeline_mode = #tpu.pipeline_mode<synchronous>, transform_indices = @transform_5, window_bounds = array<i64: 1, 24>}, {transform_indices = @transform_6, window_bounds = array<i64: 1, 16, 24>}]} {
    %c0_i32 = arith.constant 0 : i32
    %0 = arith.cmpi eq, %arg1, %c0_i32 : i32
    %1 = arith.extui %0 : i1 to i32
    %c0_i32_0 = arith.constant 0 : i32
    %2 = arith.cmpi ne, %1, %c0_i32_0 : i32
    scf.if %2 {
      %cst_27 = arith.constant 0.000000e+00 : bf16
      %46 = vector.broadcast %cst_27 : bf16 to vector<4x8xbf16>
      %c0_28 = arith.constant 0 : index
      %c0_29 = arith.constant 0 : index
      %47 = vector.load %arg9[%c0_28, %c0_29] : memref<4x8xbf16, #tpu.memory_space<vmem>>, vector<4x8xbf16>
      tpu.vector_store %arg9[%c0_28, %c0_29], %46 {strides = array<i32>} : memref<4x8xbf16, #tpu.memory_space<vmem>>, vector<4x8xbf16>,
      %cst_30 = arith.constant 0.000000e+00 : bf16
      %48 = vector.broadcast %cst_30 : bf16 to vector<4x16xbf16>
      %c0_31 = arith.constant 0 : index
      %c0_32 = arith.constant 0 : index
      %49 = vector.load %arg10[%c0_31, %c0_32] : memref<4x16xbf16, #tpu.memory_space<vmem>>, vector<4x16xbf16>
      tpu.vector_store %arg10[%c0_31, %c0_32], %48 {strides = array<i32>} : memref<4x16xbf16, #tpu.memory_space<vmem>>, vector<4x16xbf16>,
    } else {
    }
    %c0 = arith.constant 0 : index
    %c0_1 = arith.constant 0 : index
    %c0_2 = arith.constant 0 : index
    %3 = vector.load %arg2[%c0, %c0_1, %c0_2] : memref<1x16x8xbf16, #tpu.memory_space<vmem>>, vector<1x16x8xbf16>
    %4 = vector.shape_cast %3 : vector<1x16x8xbf16> to vector<16x8xbf16>
    %c0_3 = arith.constant 0 : index
    %c0_4 = arith.constant 0 : index
    %5 = vector.load %arg9[%c0_3, %c0_4] : memref<4x8xbf16, #tpu.memory_space<vmem>>, vector<4x8xbf16>
    %6 = tpu.concatenate %5, %4 in 0 : vector<4x8xbf16>, vector<16x8xbf16> -> vector<20x8xbf16>
    %c0_5 = arith.constant 0 : index
    %c0_6 = arith.constant 0 : index
    %7 = vector.load %arg3[%c0_5, %c0_6] : memref<8x72xbf16, #tpu.memory_space<vmem>>, vector<8x72xbf16>
    %cst = arith.constant dense<0.000000e+00> : vector<20x72xf32>
    %8 = tpu.matmul %6, %7, %cst {dimension_numbers = #tpu.dot_dimension_numbers<[1], [0], [0], [1], [0, 0, 1, 1], [], []>} : vector<20x8xbf16>, vector<8x72xbf16>, vector<20x72xf32> -> vector<20x72xf32>
    %c0_7 = arith.constant 0 : index
    %c0_8 = arith.constant 0 : index
    %9 = vector.load %arg4[%c0_7, %c0_8] : memref<1x16xf32, #tpu.memory_space<vmem>>, vector<1x16xf32>
    %10 = vector.extract_strided_slice %8 {offsets = [0, 0], sizes = [16, 16], strides = [1, 1]} : vector<20x72xf32> to vector<16x16xf32>
    %11 = vector.broadcast %9 : vector<1x16xf32> to vector<16x16xf32>
    %12 = arith.addf %11, %10 : vector<16x16xf32>
    %13 = vector.extract_strided_slice %8 {offsets = [2, 16], sizes = [16, 16], strides = [1, 1]} : vector<20x72xf32> to vector<16x16xf32>
    %14 = arith.addf %12, %13 : vector<16x16xf32>
    %15 = vector.extract_strided_slice %8 {offsets = [4, 32], sizes = [16, 16], strides = [1, 1]} : vector<20x72xf32> to vector<16x16xf32>
    %16 = arith.addf %14, %15 : vector<16x16xf32>
    %cst_9 = arith.constant 0.000000e+00 : f32
    %17 = vector.broadcast %cst_9 : f32 to vector<16x16xf32>
    %18 = arith.maximumf %16, %17 : vector<16x16xf32>
    %c0_10 = arith.constant 0 : index
    %c0_11 = arith.constant 0 : index
    %19 = vector.load %arg7[%c0_10, %c0_11] : memref<1x24xf32, #tpu.memory_space<vmem>>, vector<1x24xf32>
    %20 = vector.extract_strided_slice %8 {offsets = [4, 48], sizes = [16, 24], strides = [1, 1]} : vector<20x72xf32> to vector<16x24xf32>
    %21 = vector.broadcast %19 : vector<1x24xf32> to vector<16x24xf32>
    %22 = arith.addf %21, %20 : vector<16x24xf32>
    %23 = arith.truncf %18 : vector<16x16xf32> to vector<16x16xbf16>
    %c0_12 = arith.constant 0 : index
    %c0_13 = arith.constant 0 : index
    %24 = vector.load %arg10[%c0_12, %c0_13] : memref<4x16xbf16, #tpu.memory_space<vmem>>, vector<4x16xbf16>
    %25 = tpu.concatenate %24, %23 in 0 : vector<4x16xbf16>, vector<16x16xbf16> -> vector<20x16xbf16>
    %c0_14 = arith.constant 0 : index
    %c0_15 = arith.constant 0 : index
    %26 = vector.load %arg5[%c0_14, %c0_15] : memref<16x72xbf16, #tpu.memory_space<vmem>>, vector<16x72xbf16>
    %cst_16 = arith.constant dense<0.000000e+00> : vector<20x72xf32>
    %27 = tpu.matmul %25, %26, %cst_16 {dimension_numbers = #tpu.dot_dimension_numbers<[1], [0], [0], [1], [0, 0, 1, 1], [], []>} : vector<20x16xbf16>, vector<16x72xbf16>, vector<20x72xf32> -> vector<20x72xf32>
    %c0_17 = arith.constant 0 : index
    %c0_18 = arith.constant 0 : index
    %28 = vector.load %arg6[%c0_17, %c0_18] : memref<1x24xf32, #tpu.memory_space<vmem>>, vector<1x24xf32>
    %29 = vector.extract_strided_slice %27 {offsets = [0, 0], sizes = [16, 24], strides = [1, 1]} : vector<20x72xf32> to vector<16x24xf32>
    %30 = vector.broadcast %28 : vector<1x24xf32> to vector<16x24xf32>
    %31 = arith.addf %30, %29 : vector<16x24xf32>
    %32 = vector.extract_strided_slice %27 {offsets = [2, 24], sizes = [16, 24], strides = [1, 1]} : vector<20x72xf32> to vector<16x24xf32>
    %33 = arith.addf %31, %32 : vector<16x24xf32>
    %34 = vector.extract_strided_slice %27 {offsets = [4, 48], sizes = [16, 24], strides = [1, 1]} : vector<20x72xf32> to vector<16x24xf32>
    %35 = arith.addf %33, %34 : vector<16x24xf32>
    %36 = arith.addf %35, %22 : vector<16x24xf32>
    %cst_19 = arith.constant 0.000000e+00 : f32
    %37 = vector.broadcast %cst_19 : f32 to vector<16x24xf32>
    %38 = arith.maximumf %36, %37 : vector<16x24xf32>
    %c0_20 = arith.constant 0 : index
    %c0_21 = arith.constant 0 : index
    %c0_22 = arith.constant 0 : index
    %39 = vector.load %arg8[%c0_20, %c0_21, %c0_22] : memref<1x16x24xf32, #tpu.memory_space<vmem>>, vector<1x16x24xf32>
    %40 = vector.shape_cast %39 : vector<1x16x24xf32> to vector<16x24xf32>
    %41 = vector.shape_cast %38 : vector<16x24xf32> to vector<1x16x24xf32>
    tpu.vector_store %arg8[%c0_20, %c0_21, %c0_22], %41 {strides = array<i32>} : memref<1x16x24xf32, #tpu.memory_space<vmem>>, vector<1x16x24xf32>,
    %42 = vector.extract_strided_slice %4 {offsets = [12, 0], sizes = [4, 8], strides = [1, 1]} : vector<16x8xbf16> to vector<4x8xbf16>
    %c0_23 = arith.constant 0 : index
    %c0_24 = arith.constant 0 : index
    %43 = vector.load %arg9[%c0_23, %c0_24] : memref<4x8xbf16, #tpu.memory_space<vmem>>, vector<4x8xbf16>
    tpu.vector_store %arg9[%c0_23, %c0_24], %42 {strides = array<i32>} : memref<4x8xbf16, #tpu.memory_space<vmem>>, vector<4x8xbf16>,
    %44 = vector.extract_strided_slice %23 {offsets = [12, 0], sizes = [4, 16], strides = [1, 1]} : vector<16x16xbf16> to vector<4x16xbf16>
    %c0_25 = arith.constant 0 : index
    %c0_26 = arith.constant 0 : index
    %45 = vector.load %arg10[%c0_25, %c0_26] : memref<4x16xbf16, #tpu.memory_space<vmem>>, vector<4x16xbf16>
    tpu.vector_store %arg10[%c0_25, %c0_26], %44 {strides = array<i32>} : memref<4x16xbf16, #tpu.memory_space<vmem>>, vector<4x16xbf16>,
    return
  }
  func.func @transform_0(%arg0: i32, %arg1: i32) -> (i32, i32, i32) {
    %c0_i32 = arith.constant 0 : i32
    %c0_i32_0 = arith.constant 0 : i32
    return %arg0, %arg1, %c0_i32 : i32, i32, i32
  }
  func.func @transform_1(%arg0: i32, %arg1: i32) -> (i32, i32) {
    %c0_i32 = arith.constant 0 : i32
    %c0_i32_0 = arith.constant 0 : i32
    %c0_i32_1 = arith.constant 0 : i32
    return %c0_i32, %c0_i32_0 : i32, i32
  }
  func.func @transform_2(%arg0: i32, %arg1: i32) -> (i32, i32) {
    %c0_i32 = arith.constant 0 : i32
    %c0_i32_0 = arith.constant 0 : i32
    %c0_i32_1 = arith.constant 0 : i32
    return %c0_i32, %c0_i32_0 : i32, i32
  }
  func.func @transform_3(%arg0: i32, %arg1: i32) -> (i32, i32) {
    %c0_i32 = arith.constant 0 : i32
    %c0_i32_0 = arith.constant 0 : i32
    %c0_i32_1 = arith.constant 0 : i32
    return %c0_i32, %c0_i32_0 : i32, i32
  }
  func.func @transform_4(%arg0: i32, %arg1: i32) -> (i32, i32) {
    %c0_i32 = arith.constant 0 : i32
    %c0_i32_0 = arith.constant 0 : i32
    %c0_i32_1 = arith.constant 0 : i32
    return %c0_i32, %c0_i32_0 : i32, i32
  }
  func.func @transform_5(%arg0: i32, %arg1: i32) -> (i32, i32) {
    %c0_i32 = arith.constant 0 : i32
    %c0_i32_0 = arith.constant 0 : i32
    %c0_i32_1 = arith.constant 0 : i32
    return %c0_i32, %c0_i32_0 : i32, i32
  }
  func.func @transform_6(%arg0: i32, %arg1: i32) -> (i32, i32, i32) {
    %c0_i32 = arith.constant 0 : i32
    %c0_i32_0 = arith.constant 0 : i32
    return %arg0, %arg1, %c0_i32 : i32, i32, i32
  }
}

</mosaic_0001>

<llo_original>
// kernel: tpu_custom_call.1
$region0: #{tpu_custom_call.1}
  #allocation0 [shape = 'u32[]', space=smem, size = 0x4, offset = 0x4, fixed_abs, tag = 'smem constant byte address 0x4 - core index']
  #allocation1 [shape = 'u32[72,128]{1,0:T(1,128)}', space=vmem, size = 0x9000, scoped, tag = 'internal scratch']
  #allocation2 [shape = 'bf16[4,8]{1,0:T(4,128)(2,1)}', space=vmem, size = 0x400, scoped, tag = 'scratch operand']
  #allocation3 [shape = 'bf16[4,16]{1,0:T(4,128)(2,1)}', space=vmem, size = 0x400, scoped, tag = 'scratch operand']
  %s0 = inlined_call_operand.vmem [shape: bf16[2,32,8], index: 0, kind: input, shape index: {}]
  %s1 = inlined_call_operand.vmem [shape: bf16[8,72], index: 1, kind: input, shape index: {}]
  %s2 = inlined_call_operand.vmem [shape: f32[1,16], index: 2, kind: input, shape index: {}]
  %s3 = inlined_call_operand.vmem [shape: bf16[16,72], index: 3, kind: input, shape index: {}]
  %s4 = inlined_call_operand.vmem [shape: f32[1,24], index: 4, kind: input, shape index: {}]
  %s5 = inlined_call_operand.vmem [shape: f32[1,24], index: 5, kind: input, shape index: {}]
  %s6 = inlined_call_operand.vmem [shape: f32[2,32,24], index: 6, kind: output, shape index: {}]
  %s7 = sld [smem:[#allocation0]]
  $region61: #{tpu_custom_call.1} parent=0
    _
  %s9 = ssub.s32 1, %s7
  %s10 = scalar_select 0, %s9, %s7
  loop: start=0, step=1, limit=6
  $region2: #{tpu_custom_call.1} parent=0 // loop_pre_header
    _
  $region3: #{tpu_custom_call.1} parent=0 // loop_header
    %s12 = sphi 0, %s16
    %p13 = scmp.ge.s32.totalorder %s12, 6
    %s19 = sphi 0, %s31
    %s20 = sphi 0, %s27
    %s21 = sphi 0, %s19
    %s22 = sphi 0, %s20
    %s23 = sphi 0, %s21
    %s24 = sphi 0, %s22
    %s36 = sphi 0, %s38
    %s39 = sphi 0, %s36
    %s40 = sphi 0, %s39
    %s56 = sphi 0, %s40
    %s60 = sphi 0, %s60
    %s62 = sphi 0, %s60
    %s63 = sphi 0, %s62
    %s77 = sphi 0, %s63
    %s81 = sphi 0, %s81
    %s83 = sphi 0, %s81
    %s84 = sphi 0, %s83
    %s98 = sphi 0, %s84
    %s102 = sphi 0, %s102
    %s104 = sphi 0, %s102
    %s105 = sphi 0, %s104
    %s119 = sphi 0, %s105
    %s123 = sphi 0, %s123
    %s125 = sphi 0, %s123
    %s126 = sphi 0, %s125
    %s140 = sphi 0, %s126
    %s144 = sphi 0, %s144
    %s146 = sphi 0, %s144
    %s147 = sphi 0, %s146
    %s161 = sphi 0, %s147
    %s169 = sphi 0, %s171
    %s172 = sphi 0, %s169
    %s173 = sphi 0, %s172
    %s189 = sphi 0, %s173
  $region4: #{tpu_custom_call.1} parent=0 // loop_header_branch
    %15 = sbr.rel (%p13) target = $region8
  $region5: #{tpu_custom_call.1} parent=0 // loop_body
    %s17 = ssub.s32 %s12, 1
    %s18 = ssub.s32 %s12, 2
    %s25 = sadd.s32 1, %s20
    %p26 = scmp.ge.s32.totalorder %s25, 2
    %s27 = scalar_select %p26, 0, %s25
    %s28 = sadd.s32 1, %s19
    %s29 = scalar_select %p26, %s28, %s19
    %p30 = scmp.ge.s32.totalorder %s29, 2
    %s31 = scalar_select %p30, 0, %s29
    %s32 = ssub.s32 %s19, %s31
    %s33 = ssub.s32 %s20, %s27
    %s34 = sor.u32 %s32, %s33
    %p35 = scmp.eq.s32.totalorder %s34, 0
    %s37 = sadd.s32 %s36, 1
    %s38 = scalar_select %p35, %s36, %s37
    %p41 = pneg %p35
    %p42 = scmp.eq.s32.totalorder %s12, 3
    %p43 = por %p41, %p42
    %p44 = scmp.ne.s32.totalorder %s36, %s39
    %p45 = scmp.eq.s32.totalorder %s12, 0
    %p46 = por %p44, %p45
    %p47 = scmp.ne.s32.totalorder %s36, %s39
    %p48 = scmp.eq.s32.totalorder %s17, 3
    %p49 = por %p47, %p48
    %p50 = scmp.ne.s32.totalorder %s39, %s40
    %p51 = scmp.eq.s32.totalorder %s17, 0
    %p52 = por %p50, %p51
    %p53 = scmp.ne.s32.totalorder %s39, %s40
    %p54 = scmp.eq.s32.totalorder %s18, 3
    %p55 = por %p53, %p54
    %p57 = scmp.ne.s32.totalorder %s40, %s56
    %p58 = scmp.eq.s32.totalorder %s18, 0
    %p59 = por %p57, %p58
    %s61 = sadd.s32 %s60, 1
    %p64 = scmp.eq.s32.totalorder %s12, 3
    %p65 = scmp.ne.s32.totalorder %s60, %s62
    %p66 = scmp.eq.s32.totalorder %s12, 0
    %p67 = por %p65, %p66
    %p68 = scmp.ne.s32.totalorder %s60, %s62
    %p69 = scmp.eq.s32.totalorder %s17, 3
    %p70 = por %p68, %p69
    %p71 = scmp.ne.s32.totalorder %s62, %s63
    %p72 = scmp.eq.s32.totalorder %s17, 0
    %p73 = por %p71, %p72
    %p74 = scmp.ne.s32.totalorder %s62, %s63
    %p75 = scmp.eq.s32.totalorder %s18, 3
    %p76 = por %p74, %p75
    %p78 = scmp.ne.s32.totalorder %s63, %s77
    %p79 = scmp.eq.s32.totalorder %s18, 0
    %p80 = por %p78, %p79
    %s82 = sadd.s32 %s81, 1
    %p85 = scmp.eq.s32.totalorder %s12, 3
    %p86 = scmp.ne.s32.totalorder %s81, %s83
    %p87 = scmp.eq.s32.totalorder %s12, 0
    %p88 = por %p86, %p87
    %p89 = scmp.ne.s32.totalorder %s81, %s83
    %p90 = scmp.eq.s32.totalorder %s17, 3
    %p91 = por %p89, %p90
    %p92 = scmp.ne.s32.totalorder %s83, %s84
    %p93 = scmp.eq.s32.totalorder %s17, 0
    %p94 = por %p92, %p93
    %p95 = scmp.ne.s32.totalorder %s83, %s84
    %p96 = scmp.eq.s32.totalorder %s18, 3
    %p97 = por %p95, %p96
    %p99 = scmp.ne.s32.totalorder %s84, %s98
    %p100 = scmp.eq.s32.totalorder %s18, 0
    %p101 = por %p99, %p100
    %s103 = sadd.s32 %s102, 1
    %p106 = scmp.eq.s32.totalorder %s12, 3
    %p107 = scmp.ne.s32.totalorder %s102, %s104
    %p108 = scmp.eq.s32.totalorder %s12, 0
    %p109 = por %p107, %p108
    %p110 = scmp.ne.s32.totalorder %s102, %s104
    %p111 = scmp.eq.s32.totalorder %s17, 3
    %p112 = por %p110, %p111
    %p113 = scmp.ne.s32.totalorder %s104, %s105
    %p114 = scmp.eq.s32.totalorder %s17, 0
    %p115 = por %p113, %p114
    %p116 = scmp.ne.s32.totalorder %s104, %s105
    %p117 = scmp.eq.s32.totalorder %s18, 3
    %p118 = por %p116, %p117
    %p120 = scmp.ne.s32.totalorder %s105, %s119
    %p121 = scmp.eq.s32.totalorder %s18, 0
    %p122 = por %p120, %p121
    %s124 = sadd.s32 %s123, 1
    %p127 = scmp.eq.s32.totalorder %s12, 3
    %p128 = scmp.ne.s32.totalorder %s123, %s125
    %p129 = scmp.eq.s32.totalorder %s12, 0
    %p130 = por %p128, %p129
    %p131 = scmp.ne.s32.totalorder %s123, %s125
    %p132 = scmp.eq.s32.totalorder %s17, 3
    %p133 = por %p131, %p132
    %p134 = scmp.ne.s32.totalorder %s125, %s126
    %p135 = scmp.eq.s32.totalorder %s17, 0
    %p136 = por %p134, %p135
    %p137 = scmp.ne.s32.totalorder %s125, %s126
    %p138 = scmp.eq.s32.totalorder %s18, 3
    %p139 = por %p137, %p138
    %p141 = scmp.ne.s32.totalorder %s126, %s140
    %p142 = scmp.eq.s32.totalorder %s18, 0
    %p143 = por %p141, %p142
    %s145 = sadd.s32 %s144, 1
    %p148 = scmp.eq.s32.totalorder %s12, 3
    %p149 = scmp.ne.s32.totalorder %s144, %s146
    %p150 = scmp.eq.s32.totalorder %s12, 0
    %p151 = por %p149, %p150
    %p152 = scmp.ne.s32.totalorder %s144, %s146
    %p153 = scmp.eq.s32.totalorder %s17, 3
    %p154 = por %p152, %p153
    %p155 = scmp.ne.s32.totalorder %s146, %s147
    %p156 = scmp.eq.s32.totalorder %s17, 0
    %p157 = por %p155, %p156
    %p158 = scmp.ne.s32.totalorder %s146, %s147
    %p159 = scmp.eq.s32.totalorder %s18, 3
    %p160 = por %p158, %p159
    %p162 = scmp.ne.s32.totalorder %s147, %s161
    %p163 = scmp.eq.s32.totalorder %s18, 0
    %p164 = por %p162, %p163
    %s165 = ssub.s32 %s19, %s31
    %s166 = ssub.s32 %s20, %s27
    %s167 = sor.u32 %s165, %s166
    %p168 = scmp.eq.s32.totalorder %s167, 0
    %s170 = sadd.s32 %s169, 1
    %s171 = scalar_select %p168, %s169, %s170
    %p174 = pneg %p168
    %p175 = scmp.eq.s32.totalorder %s12, 3
    %p176 = por %p174, %p175
    %p177 = scmp.ne.s32.totalorder %s169, %s172
    %p178 = scmp.eq.s32.totalorder %s12, 0
    %p179 = por %p177, %p178
    %p180 = scmp.ne.s32.totalorder %s169, %s172
    %p181 = scmp.eq.s32.totalorder %s17, 3
    %p182 = por %p180, %p181
    %p183 = scmp.ne.s32.totalorder %s172, %s173
    %p184 = scmp.eq.s32.totalorder %s17, 0
    %p185 = por %p183, %p184
    %p186 = scmp.ne.s32.totalorder %s172, %s173
    %p187 = scmp.eq.s32.totalorder %s18, 3
    %p188 = por %p186, %p187
    %p190 = scmp.ne.s32.totalorder %s173, %s189
    %p191 = scmp.eq.s32.totalorder %s18, 0
    %p192 = por %p190, %p191
    %p193 = scmp.le.s32.totalorder 1, %s12
    %p194 = scmp.lt.s32.totalorder %s12, 5
    %p195 = pnand %p193, %p194
    %p196 = pneg %p195
    // Predicated region
    $region9: #{tpu_custom_call.1} parent=5 // pred_check
      _
    $region10: #{tpu_custom_call.1} parent=5 // pred_check_branch
      %198 = sbr.rel (%p195) target = $region12
    $region11: #{tpu_custom_call.1} parent=5 // pred_region
      %s199 = ssub.s32 %s12, 1
      // Predicated region
      $region13: #{tpu_custom_call.1} parent=11 // pred_check
        %p200 = pneg %p73
      $region14: #{tpu_custom_call.1} parent=11 // pred_check_branch
        %202 = sbr.rel (%p200) target = $region16
      $region15: #{tpu_custom_call.1} parent=11 // pred_region
        _
      $region16: #{tpu_custom_call.1} parent=11 // pred_fallthru
        _
      // Predicated region
      $region17: #{tpu_custom_call.1} parent=11 // pred_check
        %p203 = pneg %p94
      $region18: #{tpu_custom_call.1} parent=11 // pred_check_branch
        %205 = sbr.rel (%p203) target = $region20
      $region19: #{tpu_custom_call.1} parent=11 // pred_region
        _
      $region20: #{tpu_custom_call.1} parent=11 // pred_fallthru
        _
      // Predicated region
      $region21: #{tpu_custom_call.1} parent=11 // pred_check
        %p206 = pneg %p115
      $region22: #{tpu_custom_call.1} parent=11 // pred_check_branch
        %208 = sbr.rel (%p206) target = $region24
      $region23: #{tpu_custom_call.1} parent=11 // pred_region
        _
      $region24: #{tpu_custom_call.1} parent=11 // pred_fallthru
        _
      // Predicated region
      $region25: #{tpu_custom_call.1} parent=11 // pred_check
        %p209 = pneg %p136
      $region26: #{tpu_custom_call.1} parent=11 // pred_check_branch
        %211 = sbr.rel (%p209) target = $region28
      $region27: #{tpu_custom_call.1} parent=11 // pred_region
        _
      $region28: #{tpu_custom_call.1} parent=11 // pred_fallthru
        _
      // Predicated region
      $region29: #{tpu_custom_call.1} parent=11 // pred_check
        %p212 = pneg %p157
      $region30: #{tpu_custom_call.1} parent=11 // pred_check_branch
        %214 = sbr.rel (%p212) target = $region32
      $region31: #{tpu_custom_call.1} parent=11 // pred_region
        _
      $region32: #{tpu_custom_call.1} parent=11 // pred_fallthru
        _
    $region12: #{tpu_custom_call.1} parent=5 // pred_fallthru
      _
    %p215 = scmp.lt.s32.totalorder %s12, 4
    // Predicated region
    $region33: #{tpu_custom_call.1} parent=5 // pred_check
      %p216 = pneg %p215
    $region34: #{tpu_custom_call.1} parent=5 // pred_check_branch
      %218 = sbr.rel (%p216) target = $region36
    $region35: #{tpu_custom_call.1} parent=5 // pred_region
      // Predicated region
      $region37: #{tpu_custom_call.1} parent=35 // pred_check
        %p219 = pneg %p46
      $region38: #{tpu_custom_call.1} parent=35 // pred_check_branch
        %221 = sbr.rel (%p219) target = $region40
      $region39: #{tpu_custom_call.1} parent=35 // pred_region
        %s222 = smul.u32 2, %s20
        %p223 = scmp.lt.s32.totalorder %s19, 1
        %s224 = scalar_select %p223, %s19, 1
        %p225 = scmp.lt.s32.totalorder %s222, 3
        %s226 = scalar_select %p225, %s222, 3
        %s227 = smul.addr %s224, 4
        %s228 = sadd.s32 %s226, %s227
        %s229 = smul.addr %s228, 4
        %s230 = scalar_lea.vmem %s0, %s229
        %s231 = smul.u32 2, %s20
      $region40: #{tpu_custom_call.1} parent=35 // pred_fallthru
        _
    $region36: #{tpu_custom_call.1} parent=5 // pred_fallthru
      _
    %p232 = scmp.le.s32.totalorder 1, %s12
    %p233 = scmp.lt.s32.totalorder %s12, 5
    %p234 = pnand %p232, %p233
    %p235 = pneg %p234
    // Predicated region
    $region41: #{tpu_custom_call.1} parent=5 // pred_check
      _
    $region42: #{tpu_custom_call.1} parent=5 // pred_check_branch
      %237 = sbr.rel (%p234) target = $region44
    $region43: #{tpu_custom_call.1} parent=5 // pred_region
      %s238 = ssub.s32 %s12, 1
      %s239 = smul.u32 2, %s22
      %p240 = scmp.lt.s32.totalorder %s21, 1
      %s241 = scalar_select %p240, %s21, 1
      %p242 = scmp.lt.s32.totalorder %s239, 3
      %s243 = scalar_select %p242, %s239, 3
      %s244 = smul.addr %s241, 4
      %s245 = sadd.s32 %s243, %s244
      %s246 = smul.addr %s245, 4
      %s247 = scalar_lea.vmem %s0, %s246
      %p248 = pneg %p52
      %p249 = pneg %p49
      %p250 = pneg %p73
      %p251 = pneg %p70
      %p252 = pneg %p94
      %p253 = pneg %p91
      %p254 = pneg %p115
      %p255 = pneg %p112
      %p256 = pneg %p136
      %p257 = pneg %p133
      %p258 = pneg %p157
      %p259 = pneg %p154
      %p260 = pneg %p185
      %p261 = pneg %p182
      %s262 = smul.u32 2, %s22
      %p263 = scmp.lt.s32.totalorder %s21, 1
      %s264 = scalar_select %p263, %s21, 1
      %p265 = scmp.lt.s32.totalorder %s262, 3
      %s266 = scalar_select %p265, %s262, 3
      %s267 = smul.addr %s264, 4
      %s268 = sadd.s32 %s266, %s267
      %s269 = smul.addr %s268, 8
      %s270 = scalar_lea.vmem %s6, %s269
      %s271 = smul.u32 2, %s22
      %p272 = scmp.lt.s32.totalorder %s21, 1
      %s273 = scalar_select %p272, %s21, 1
      %p274 = scmp.lt.s32.totalorder %s271, 3
      %s275 = scalar_select %p274, %s271, 3
      %s276 = smul.addr %s273, 4
      %s277 = sadd.s32 %s275, %s276
      %s278 = smul.addr %s277, 4
      %s279 = scalar_lea.vmem %s0, %s278
      %s280 = smul.u32 2, %s22
      %s281 = smul.u32 2, %s22
      %p282 = scmp.lt.s32.totalorder %s21, 1
      %s283 = scalar_select %p282, %s21, 1
      %p284 = scmp.lt.s32.totalorder %s281, 3
      %s285 = scalar_select %p284, %s281, 3
      %s286 = smul.addr %s283, 4
      %s287 = sadd.s32 %s285, %s286
      %s288 = smul.addr %s287, 8
      %s289 = scalar_lea.vmem %s6, %s288
      %s290 = smul.u32 2, %s22
      %p292 = scmp.eq.s32.totalorder %s22, 0
      // Predicated region
      $region45: #{tpu_custom_call.1} parent=43 // pred_check
        %p293 = pneg %p292
      $region46: #{tpu_custom_call.1} parent=43 // pred_check_branch
        %295 = sbr.rel (%p293) target = $region48
      $region47: #{tpu_custom_call.1} parent=43 // pred_region
        %vm296 = vcmask 58368
        %297 = vst.msk [vmem:[#allocation2] sm:$0x3] %vm296, 0
        %vm298 = vcmask 123904
        %299 = vst.msk [vmem:[#allocation3] sm:$0x3] %vm298, 0
      $region48: #{tpu_custom_call.1} parent=43 // pred_fallthru
        _
      %v300 = vld [vmem:[%s279] sm:$0xf]
      %v301 = vld [vmem:[%s279 + $0x4] sm:$0xf]
      %v302 = vld [vmem:[#allocation2] sm:$0x3]
      %v305 = vunpack.c.l.b16 %v300
      %v306 = vunpack.c.l.b16 %v301
      %v307 = vpack.c.b16 %v306, %v305
      %v308 = vrot.slane %v307, 6
      %vm309 = vcmask 1041408
      %v312 = vsel %vm309, %v302, %v308
      %v313 = vld [vmem:[%s1] sm:$0xf]
      %vm314 = vcmask 64512
      %v315 = vsel %vm314, %v312, 0
      %v317 = vsel %vm314, %v308, 0
      %vm319 = vcmask 1043456
      %v321 = vsel %vm319, %v313, 0
      %323 = vmatpush.bf16.msra.mxu0 0
      %324 = vmatpush.bf16.msra.mxu0 0
      %325 = vmatpush.bf16.msra.mxu0 0
      %326 = vmatpush.bf16.msra.mxu0 0
      %327 = vmatpush.bf16.msra.mxu0 0
      %328 = vmatpush.bf16.msra.mxu0 0
      %329 = vmatpush.bf16.msra.mxu0 0
      %330 = vmatpush.bf16.msra.mxu0 %v321
      %331 = vmatmul.bf16.gmra.mxu0 %v315
      %v332 = vpop.f32.mrf.mxu0
      %v333 = vadd.f32 0.0, %v332
      %v334 = vpop.f32.mrf.mxu0
      %v335 = vadd.f32 0.0, %v334
      %336 = vmatmul.bf16.gmra.mxu0 %v317
      %v337 = vpop.f32.mrf.mxu0
      %v338 = vadd.f32 0.0, %v337
      %v339 = vpop.f32.mrf.mxu0
      %340 = vdwg.mxu0
      %v341 = vld [vmem:[%s2] sm:$0x1]
      %v343 = vperm.slane %v341, 0
      %v345 = vadd.f32 %v343, %v333
      %v346 = vadd.f32 %v343, %v335
      %vm350 = vcmask 1045504
      %v351 = vrot.slane %v333, 2
      %v352 = vrot.slane %v335, 2
      %v353 = vsel %vm350, %v351, %v352
      %v354 = vrot.slane %v338, 2
      %v355 = vsel %vm350, %v352, %v354
      %356 = vrot.lane.b32.xlu0 %v353, 112
      %v357 = vpop.permute.xlu0 %356
      %358 = vrot.lane.b32.xlu0 %v355, 112
      %v359 = vpop.permute.xlu0 %358
      %v362 = vadd.f32 %v345, %v357
      %v363 = vadd.f32 %v346, %v359
      %v364 = vrot.slane %v333, 4
      %v365 = vrot.slane %v335, 4
      %v366 = vsel %vm319, %v364, %v365
      %v367 = vrot.slane %v338, 4
      %v368 = vsel %vm319, %v365, %v367
      %369 = vrot.lane.b32.xlu0 %v366, 96
      %v370 = vpop.permute.xlu0 %369
      %371 = vrot.lane.b32.xlu0 %v368, 96
      %v372 = vpop.permute.xlu0 %371
      %v375 = vadd.f32 %v362, %v370
      %v376 = vadd.f32 %v363, %v372
      %v377 = vmax.f32 %v375, 0.0
      %v378 = vmax.f32 %v376, 0.0
      %v379 = vld [vmem:[%s5] sm:$0x1]
      %v381 = vperm.slane %v379, 0
      %383 = vrot.lane.b32.xlu0 %v366, 80
      %v384 = vpop.permute.xlu0 %383
      %385 = vrot.lane.b32.xlu0 %v368, 80
      %v386 = vpop.permute.xlu0 %385
      %v389 = vadd.f32 %v381, %v384
      %v390 = vadd.f32 %v381, %v386
      %v391 = vpack.c.bf16 %v377, %v377
      %v392 = vpack.c.bf16 %v378, %v378
      %v393 = vld [vmem:[#allocation3] sm:$0x3]
      %v396 = vunpack.c.l.b16 %v391
      %v397 = vunpack.c.l.b16 %v392
      %v398 = vpack.c.b16 %v397, %v396
      %v399 = vrot.slane %v398, 6
      %v402 = vsel %vm309, %v393, %v399
      %v403 = vld [vmem:[%s3] sm:$0xf]
      %v404 = vld [vmem:[%s3 + $0x4] sm:$0xf]
      %v407 = vunpack.c.l.b16 %v403
      %v408 = vunpack.c.l.b16 %v404
      %v409 = vpack.c.b16 %v408, %v407
      %vm411 = vcmask 130048
      %v412 = vsel %vm411, %v402, 0
      %v414 = vsel %vm411, %v399, 0
      %416 = vmatpush.bf16.msra.mxu0 0
      %417 = vmatpush.bf16.msra.mxu0 0
      %418 = vmatpush.bf16.msra.mxu0 0
      %419 = vmatpush.bf16.msra.mxu0 0
      %420 = vmatpush.bf16.msra.mxu0 0
      %421 = vmatpush.bf16.msra.mxu0 0
      %422 = vmatpush.bf16.msra.mxu0 0
      %423 = vmatpush.bf16.msra.mxu0 %v409
      %424 = vmatmul.bf16.gmra.mxu0 %v412
      %v425 = vpop.f32.mrf.mxu0
      %v426 = vadd.f32 0.0, %v425
      %v427 = vpop.f32.mrf.mxu0
      %v428 = vadd.f32 0.0, %v427
      %429 = vmatmul.bf16.gmra.mxu0 %v414
      %v430 = vpop.f32.mrf.mxu0
      %v431 = vadd.f32 0.0, %v430
      %v432 = vpop.f32.mrf.mxu0
      %433 = vdwg.mxu0
      %v434 = vld [vmem:[%s4] sm:$0x1]
      %v436 = vperm.slane %v434, 0
      %v438 = vadd.f32 %v436, %v426
      %v439 = vadd.f32 %v436, %v428
      %v443 = vrot.slane %v426, 2
      %v444 = vrot.slane %v428, 2
      %v445 = vsel %vm350, %v443, %v444
      %v446 = vrot.slane %v431, 2
      %v447 = vsel %vm350, %v444, %v446
      %448 = vrot.lane.b32.xlu0 %v445, 104
      %v449 = vpop.permute.xlu0 %448
      %450 = vrot.lane.b32.xlu0 %v447, 104
      %v451 = vpop.permute.xlu0 %450
      %v454 = vadd.f32 %v438, %v449
      %v455 = vadd.f32 %v439, %v451
      %v456 = vrot.slane %v426, 4
      %v457 = vrot.slane %v428, 4
      %v458 = vsel %vm319, %v456, %v457
      %v459 = vrot.slane %v431, 4
      %v460 = vsel %vm319, %v457, %v459
      %461 = vrot.lane.b32.xlu0 %v458, 80
      %v462 = vpop.permute.xlu0 %461
      %463 = vrot.lane.b32.xlu0 %v460, 80
      %v464 = vpop.permute.xlu0 %463
      %v467 = vadd.f32 %v454, %v462
      %v468 = vadd.f32 %v455, %v464
      %v469 = vadd.f32 %v467, %v389
      %v470 = vadd.f32 %v468, %v390
      %v471 = vmax.f32 %v469, 0.0
      %v472 = vmax.f32 %v470, 0.0
      %vm473 = vcmask 195584
      %474 = vst.msk [vmem:[%s289] sm:$0xff] %vm473, %v471
      %475 = vst.msk [vmem:[%s289 + $0x8] sm:$0xff] %vm473, %v472
      %477 = vst.sshfl [vmem:[#allocation1] sm:$0xff pattern:$0x75643120] %v301
      %s478 = scalar_lea.vmem [#allocation1], 1
      %v479 = vld [vmem:[%s478] ss:$2 sm:$0xff]
      %vm481 = vcmask 58368
      %482 = vst.msk [vmem:[#allocation2] sm:$0x3] %vm481, %v479
      %484 = vst.sshfl [vmem:[#allocation1] sm:$0xff pattern:$0x75643120] %v392
      %s485 = scalar_lea.vmem [#allocation1], 1
      %v486 = vld [vmem:[%s485] ss:$2 sm:$0xff]
      %vm488 = vcmask 123904
      %489 = vst.msk [vmem:[#allocation3] sm:$0x3] %vm488, %v486
      %s490 = smul.u32 2, %s22
      %p491 = scmp.lt.s32.totalorder %s21, 1
      %s492 = scalar_select %p491, %s21, 1
      %p493 = scmp.lt.s32.totalorder %s490, 3
      %s494 = scalar_select %p493, %s490, 3
      %s495 = smul.addr %s492, 4
      %s496 = sadd.s32 %s494, %s495
      %s497 = smul.addr %s496, 8
      %s498 = scalar_lea.vmem %s6, %s497
      // Predicated region
      $region49: #{tpu_custom_call.1} parent=43 // pred_check
        %p499 = pneg %p182
      $region50: #{tpu_custom_call.1} parent=43 // pred_check_branch
        %501 = sbr.rel (%p499) target = $region52
      $region51: #{tpu_custom_call.1} parent=43 // pred_region
        %s502 = smul.u32 2, %s22
      $region52: #{tpu_custom_call.1} parent=43 // pred_fallthru
        _
    $region44: #{tpu_custom_call.1} parent=5 // pred_fallthru
      _
    %p503 = scmp.le.s32.totalorder 2, %s12
    // Predicated region
    $region53: #{tpu_custom_call.1} parent=5 // pred_check
      %p504 = pneg %p503
    $region54: #{tpu_custom_call.1} parent=5 // pred_check_branch
      %506 = sbr.rel (%p504) target = $region56
    $region55: #{tpu_custom_call.1} parent=5 // pred_region
      %s507 = ssub.s32 %s12, 2
      // Predicated region
      $region57: #{tpu_custom_call.1} parent=55 // pred_check
        %p508 = pneg %p188
      $region58: #{tpu_custom_call.1} parent=55 // pred_check_branch
        %510 = sbr.rel (%p508) target = $region60
      $region59: #{tpu_custom_call.1} parent=55 // pred_region
        %s511 = smul.u32 2, %s24
        %p512 = scmp.lt.s32.totalorder %s23, 1
        %s513 = scalar_select %p512, %s23, 1
        %p514 = scmp.lt.s32.totalorder %s511, 3
        %s515 = scalar_select %p514, %s511, 3
        %s516 = smul.addr %s513, 4
        %s517 = sadd.s32 %s515, %s516
        %s518 = smul.addr %s517, 8
        %s519 = scalar_lea.vmem %s6, %s518
      $region60: #{tpu_custom_call.1} parent=55 // pred_fallthru
        _
    $region56: #{tpu_custom_call.1} parent=5 // pred_fallthru
      _
  $region6: #{tpu_custom_call.1} parent=0 // loop_footer
    %s16 = sadd.s32 1, %s12
  $region7: #{tpu_custom_call.1} parent=0 // loop_footer_branch
    %11 = sbr.rel target = $region3
  $region8: #{tpu_custom_call.1} parent=0 // loop_exit
    _

</llo_original>
